<compile_context>
chip_gen: v6e
topology: v6e:2x2x1
jax: 0.10.0
libtpu: 0.0.40
codegen_flags: <defaults>
</compile_context>

<pallas_src>
import jax
import jax.numpy as jnp
from jax.experimental import pallas as pl
from jax.experimental.pallas import tpu as pltpu

_SUBLANE = 8            # f32 sublane alignment for batch tiles
_SMALL_B = 1024         # at/below this, a single un-gridded call (whole problem in VMEM)
_TM_MAX = 2048          # max batch tile for the tiled path
_VMEM_BUDGET = 32 << 20  # conservative scoped-VMEM budget (safe on v5e/v6e/v7x)


def _round_up(n, m):
    return ((n + m - 1) // m) * m


def _linear_kernel(x_ref, w_ref, b_ref, o_ref):
    # Single MXU matmul with f32 accumulation + VPU bias broadcast add, all in VMEM.
    acc = jnp.dot(x_ref[...], w_ref[...], preferred_element_type=jnp.float32)
    o_ref[...] = (acc + b_ref[...]).astype(o_ref.dtype)


def prepare_params(w_torch, bias):
    """One-time parameter prep (hoisted out of the per-call path):
    PyTorch (OUT, IN) weight -> (IN, OUT); bias (OUT,) -> (1, OUT)."""
    return jnp.asarray(w_torch).T, jnp.asarray(bias).reshape(1, -1)


def linear_pallas(x, w_io, bias_2d):
    """x: (B, IN) f32, w_io: (IN, OUT) f32, bias_2d: (1, OUT) f32 -> (B, OUT) f32,
    numerically identical to nn.Linear."""
    B, IN = x.shape
    OUT = w_io.shape[1]

    # Accurate (unpadded) traffic — advisory hint for XLA's scheduler.
    cost = pl.CostEstimate(
        flops=2 * B * IN * OUT,
        transcendentals=0,
        bytes_accessed=4 * (B * IN + IN * OUT + OUT + B * OUT),
    )

    if B <= _SMALL_B:
        # Small batch: single invocation, no grid, no pipelining machinery,
        # no padding glue.  Full-array block dims satisfy the (8,128) rule.
        return pl.pallas_call(
            _linear_kernel,
            out_shape=jax.ShapeDtypeStruct((B, OUT), x.dtype),
            cost_estimate=cost,
        )(x, w_io, bias_2d)

    # Large batch: tile over B only (memory-bound); weights/bias stay
    # resident in VMEM (their index_map always returns block (0, 0)).
    # Cap TM so there are >= 2 grid steps -> both v7x TensorCores get work.
    tm = min(_TM_MAX, _round_up(pl.cdiv(B, 2), _SUBLANE))
    n_tiles = pl.cdiv(B, tm)  # ragged last tile: OOB reads masked, OOB writes dropped

    # Resident weights/bias + double-buffered x/out tiles must fit scoped VMEM.
    working_set = 4 * (IN * OUT + OUT) + 2 * 4 * tm * (IN + OUT)
    assert working_set < _VMEM_BUDGET, "batch tile too large for scoped VMEM"

    return pl.pallas_call(
        _linear_kernel,
        out_shape=jax.ShapeDtypeStruct((B, OUT), x.dtype),
        grid=(n_tiles,),
        in_specs=[
            pl.BlockSpec((tm, IN), lambda i: (i, 0)),     # x: (TM, 10) unpadded rows
            pl.BlockSpec((IN, OUT), lambda i: (0, 0)),    # W resident in VMEM
            pl.BlockSpec((1, OUT), lambda i: (0, 0)),     # bias resident in VMEM
        ],
        out_specs=pl.BlockSpec((tm, OUT), lambda i: (i, 0)),  # out: (TM, 2) unpadded
        compiler_params=pltpu.CompilerParams(
            dimension_semantics=("parallel",),            # megacore / 2-TC sharding
        ),
        cost_estimate=cost,
    )(x, w_io, bias_2d)


if __name__ == "__main__":
    key = jax.random.PRNGKey(0)
    k_x, k_w, k_b = jax.random.split(key, 3)

    B, IN, OUT = 8, 10, 2

    # Deterministic parameter init mimicking nn.Linear default
    # (uniform(-1/sqrt(IN), 1/sqrt(IN))).
    bound = 1.0 / (IN ** 0.5)
    w_t = jax.random.uniform(k_w, (OUT, IN), jnp.float32, -bound, bound)  # torch layout
    bias = jax.random.uniform(k_b, (OUT,), jnp.float32, -bound, bound)
    x = jax.random.normal(k_x, (B, IN), jnp.float32)

    # One-time init-time parameter prep (no longer in the per-call path).
    w_io, bias_2d = prepare_params(w_t, bias)

    out = linear_pallas(x, w_io, bias_2d)
    out = jax.block_until_ready(out)

    # Reference check against plain JAX linear.
    ref = x @ w_t.T + bias[None, :]
    assert out.shape == (B, OUT)
    assert jnp.allclose(out, ref, atol=1e-5, rtol=1e-5), "mismatch vs reference"

    print("KERNEL_OK")
</pallas_src>

<mosaic_0001>
module attributes {stable_mosaic.version = 11 : i64} {
  func.func @_linear_kernel(%arg0: memref<8x10xf32, #tpu.memory_space<vmem>>, %arg1: memref<10x2xf32, #tpu.memory_space<vmem>>, %arg2: memref<1x2xf32, #tpu.memory_space<vmem>>, %arg3: memref<8x2xf32, #tpu.memory_space<vmem>>) attributes {dimension_semantics = [], scalar_prefetch = 0 : i64, scratch_operands = 0 : i64, tpu.core_type = #tpu.core_type<tc>} {
    %c0 = arith.constant 0 : index
    %c0_0 = arith.constant 0 : index
    %0 = vector.load %arg0[%c0, %c0_0] : memref<8x10xf32, #tpu.memory_space<vmem>>, vector<8x10xf32>
    %c0_1 = arith.constant 0 : index
    %c0_2 = arith.constant 0 : index
    %1 = vector.load %arg1[%c0_1, %c0_2] : memref<10x2xf32, #tpu.memory_space<vmem>>, vector<10x2xf32>
    %cst = arith.constant dense<0.000000e+00> : vector<8x2xf32>
    %2 = tpu.matmul %0, %1, %cst {dimension_numbers = #tpu.dot_dimension_numbers<[1], [0], [0], [1], [0, 0, 1, 1], [], []>} : vector<8x10xf32>, vector<10x2xf32>, vector<8x2xf32> -> vector<8x2xf32>
    %c0_3 = arith.constant 0 : index
    %c0_4 = arith.constant 0 : index
    %3 = vector.load %arg2[%c0_3, %c0_4] : memref<1x2xf32, #tpu.memory_space<vmem>>, vector<1x2xf32>
    %4 = vector.broadcast %3 : vector<1x2xf32> to vector<8x2xf32>
    %5 = arith.addf %2, %4 : vector<8x2xf32>
    %c0_5 = arith.constant 0 : index
    %c0_6 = arith.constant 0 : index
    %6 = vector.load %arg3[%c0_5, %c0_6] : memref<8x2xf32, #tpu.memory_space<vmem>>, vector<8x2xf32>
    tpu.vector_store %arg3[%c0_5, %c0_6], %5 {strides = array<i32>} : memref<8x2xf32, #tpu.memory_space<vmem>>, vector<8x2xf32>,
    return
  }
}

</mosaic_0001>

<llo_original>
// kernel: tpu_custom_call.1
$region0: #{tpu_custom_call.1}
  #allocation0 [shape = 'u32[]', space=smem, size = 0x4, offset = 0x4, fixed_abs, tag = 'smem constant byte address 0x4 - core index']
  #allocation1 [shape = 'u32[144,128]{1,0:T(1,128)}', space=vmem, size = 0x12000, scoped, tag = 'internal scratch']
  %s0 = inlined_call_operand.vmem [shape: f32[8,10], index: 0, kind: input, shape index: {}]
  %s1 = inlined_call_operand.vmem [shape: f32[10,2], index: 1, kind: input, shape index: {}]
  %s2 = inlined_call_operand.vmem [shape: f32[1,2], index: 2, kind: input, shape index: {}]
  %s3 = inlined_call_operand.vmem [shape: f32[8,2], index: 3, kind: output, shape index: {}]
  %s4 = sld [smem:[#allocation0]]
  $region22: #{tpu_custom_call.1} parent=0
    _
  %s6 = ssub.s32 1, %s4
  %s7 = scalar_select 0, %s6, %s4
  // Predicated region
  $region2: #{tpu_custom_call.1} parent=0 // pred_check
    _
  $region3: #{tpu_custom_call.1} parent=0 // pred_check_branch
    %9 = sbr.rel (0) target = $region5
  $region4: #{tpu_custom_call.1} parent=0 // pred_region
    _
  $region5: #{tpu_custom_call.1} parent=0 // pred_fallthru
    _
  // Predicated region
  $region6: #{tpu_custom_call.1} parent=0 // pred_check
    _
  $region7: #{tpu_custom_call.1} parent=0 // pred_check_branch
    %11 = sbr.rel (0) target = $region9
  $region8: #{tpu_custom_call.1} parent=0 // pred_region
    _
  $region9: #{tpu_custom_call.1} parent=0 // pred_fallthru
    _
  // Predicated region
  $region10: #{tpu_custom_call.1} parent=0 // pred_check
    _
  $region11: #{tpu_custom_call.1} parent=0 // pred_check_branch
    %13 = sbr.rel (0) target = $region13
  $region12: #{tpu_custom_call.1} parent=0 // pred_region
    _
  $region13: #{tpu_custom_call.1} parent=0 // pred_fallthru
    _
  %v14 = vld [vmem:[%s0] sm:$0xff]
  %v15 = vld [vmem:[%s1] sm:$0xff]
  %v16 = vld [vmem:[%s1 + $0x8] sm:$0x3]
  %v17 = vld [vmem:[%s2] sm:$0x1]
  %v19 = vlaneseq
  %v20 = vshrl.u32 %v19, 7
  %v21 = vsub.s32 0, %v20
  %v22 = vrot.slane %v17, %v21
  %vm24 = vcmask 80896
  %v26 = vsel %vm24, %v14, 0
  %vm28 = vcmask 1041408
  %v30 = vsel %vm28, %v16, 0
  %32 = vmatprep.subr.mxu0 0.0
  %33 = vmatpush1.msra.mxu0 0.0
  %34 = vmatprep.subr.mxu0 0.0
  %35 = vmatpush1.msra.mxu0 0.0
  %36 = vmatprep.subr.mxu0 0.0
  %37 = vmatpush1.msra.mxu0 0.0
  %38 = vmatprep.subr.mxu0 0.0
  %39 = vmatpush1.msra.mxu0 0.0
  %40 = vmatprep.subr.mxu0 0.0
  %41 = vmatpush1.msra.mxu0 0.0
  %42 = vmatprep.subr.mxu0 0.0
  %43 = vmatpush1.msra.mxu0 0.0
  %44 = vmatprep.subr.mxu0 0.0
  %45 = vmatpush1.msra.mxu0 0.0
  %46 = vmatprep.subr.mxu0 0.0
  %47 = vmatpush1.msra.mxu0 0.0
  %48 = vmatprep.subr.mxu0 0.0
  %49 = vmatpush1.msra.mxu0 0.0
  %50 = vmatprep.subr.mxu0 0.0
  %51 = vmatpush1.msra.mxu0 0.0
  %52 = vmatprep.subr.mxu0 0.0
  %53 = vmatpush1.msra.mxu0 0.0
  %54 = vmatprep.subr.mxu0 0.0
  %55 = vmatpush1.msra.mxu0 0.0
  %56 = vmatprep.subr.mxu0 0.0
  %57 = vmatpush1.msra.mxu0 0.0
  %58 = vmatprep.subr.mxu0 0.0
  %59 = vmatpush1.msra.mxu0 0.0
  %60 = vmatprep.subr.mxu0 0.0
  %61 = vmatpush1.msra.mxu0 %v30
  %62 = vmatprep.subr.mxu0 0.0
  %63 = vmatpush1.msra.mxu0 %v15
  %64 = vmatprep.subr.mxu0 0.0
  %65 = vmatpush2.msra.mxu0 0.0
  %66 = vmatprep.subr.mxu0 0.0
  %67 = vmatpush2.msra.mxu0 0.0
  %68 = vmatprep.subr.mxu0 0.0
  %69 = vmatpush2.msra.mxu0 0.0
  %70 = vmatprep.subr.mxu0 0.0
  %71 = vmatpush2.msra.mxu0 0.0
  %72 = vmatprep.subr.mxu0 0.0
  %73 = vmatpush2.msra.mxu0 0.0
  %74 = vmatprep.subr.mxu0 0.0
  %75 = vmatpush2.msra.mxu0 0.0
  %76 = vmatprep.subr.mxu0 0.0
  %77 = vmatpush2.msra.mxu0 0.0
  %78 = vmatprep.subr.mxu0 0.0
  %79 = vmatpush2.msra.mxu0 0.0
  %80 = vmatprep.subr.mxu0 0.0
  %81 = vmatpush2.msra.mxu0 0.0
  %82 = vmatprep.subr.mxu0 0.0
  %83 = vmatpush2.msra.mxu0 0.0
  %84 = vmatprep.subr.mxu0 0.0
  %85 = vmatpush2.msra.mxu0 0.0
  %86 = vmatprep.subr.mxu0 0.0
  %87 = vmatpush2.msra.mxu0 0.0
  %88 = vmatprep.subr.mxu0 0.0
  %89 = vmatpush2.msra.mxu0 0.0
  %90 = vmatprep.subr.mxu0 0.0
  %91 = vmatpush2.msra.mxu0 0.0
  %92 = vmatprep.subr.mxu0 0.0
  %93 = vmatpush2.msra.mxu0 0.0
  %94 = vmatprep.subr.mxu0 0.0
  %95 = vmatpush2.msra.mxu0 0.0
  %96 = vmatprep.mubr.f32.mxu0 0.0
  %97 = vmatmul.mubr.f32.gmra.mxu0 %v26
  %v98 = vpop.f32.mrf.mxu0
  %v99 = vadd.f32 %v22, %v98
  %v100 = vpop.f32.mrf.mxu0
  %101 = vdwg.mxu0
  %vm102 = vcmask 15360
  %103 = vst.msk [vmem:[%s3] sm:$0xff] %vm102, %v99
  // Predicated region
  $region14: #{tpu_custom_call.1} parent=0 // pred_check
    _
  $region15: #{tpu_custom_call.1} parent=0 // pred_check_branch
    %105 = sbr.rel (0) target = $region17
  $region16: #{tpu_custom_call.1} parent=0 // pred_region
    _
  $region17: #{tpu_custom_call.1} parent=0 // pred_fallthru
    _
  // Predicated region
  $region18: #{tpu_custom_call.1} parent=0 // pred_check
    _
  $region19: #{tpu_custom_call.1} parent=0 // pred_check_branch
    %107 = sbr.rel (0) target = $region21
  $region20: #{tpu_custom_call.1} parent=0 // pred_region
    _
  $region21: #{tpu_custom_call.1} parent=0 // pred_fallthru
    _

</llo_original>
